<compile_context>
chip_gen: v5e
topology: v5e:2x2
jax: 0.10.0
libtpu: 0.0.40
codegen_flags: <defaults>
</compile_context>

<pallas_src>
import functools

import jax
import jax.numpy as jnp
from jax.experimental import pallas as pl
from jax.experimental.pallas import tpu as pltpu


def _cdiv(a, b):
    return -(-a // b)


def _round_up(a, m):
    return _cdiv(a, m) * m


def _vmem_capacity_bytes():
    try:
        return int(pltpu.get_tpu_info().vmem_capacity_bytes)
    except Exception:
        return 64 << 20  # conservative (v7x-sized) fallback


# --------------------------------------------------------------------------
# Kernel
# --------------------------------------------------------------------------
def _outconv_kernel(x_ref, w_ref, b_ref, o_ref, *, n_blk, precision):
    """Per grid step: Y = W @ X + b on one (batch-block, spatial-tile).

    x_ref: (n_blk, C_in,  TS)  VMEM, spatial axis lane-dense
    w_ref: (C_out, C_in)       VMEM, resident across the whole grid
    b_ref: (C_out, 1)          VMEM, float32
    o_ref: (n_blk, C_out, TS)  VMEM
    """
    w = w_ref[...]
    b = b_ref[...]
    for nb in range(n_blk):  # static unroll; n_blk is small (<= 16)
        acc = jnp.dot(w, x_ref[nb], precision=precision,
                      preferred_element_type=jnp.float32)
        o_ref[nb] = (acc + b).astype(o_ref.dtype)


# --------------------------------------------------------------------------
# Tiling heuristics
# --------------------------------------------------------------------------
def _choose_tiling(N, C_in, C_out, HW, itemsize, vmem_cap):
    """Pick (n_blk, tile_s): lane tile multiple of 128, sized from a VMEM budget."""
    c_max = max(C_in, C_out)
    hw_pad = _round_up(max(HW, 1), 128)

    # Per-buffer block budget: larger on 128-MiB-VMEM chips (v5e/v6e), smaller on v7x.
    per_buf_budget = (8 << 20) if vmem_cap >= (100 << 20) else (4 << 20)

    tile_s = (per_buf_budget // max(1, c_max * itemsize)) // 128 * 128
    tile_s = max(128, min(tile_s, hw_pad))

    # Keep >= 4 grid steps where possible (v7x megacore sharding, overhead amortization).
    min_steps = 4
    while tile_s > 128 and N * _cdiv(HW, tile_s) < min_steps:
        tile_s = max(128, (tile_s // 2) // 128 * 128)

    # If all of H*W fits into one spatial tile, block several batch items per step.
    n_blk = 1
    if tile_s >= hw_pad and N > 1:
        max_nb = per_buf_budget // max(1, c_max * tile_s * itemsize)
        max_nb = int(max(1, min(max_nb, 16, N)))
        target_steps = min(N, min_steps)
        for cand in range(max_nb, 0, -1):
            if N % cand == 0 and (N // cand) >= target_steps:
                n_blk = cand
                break
    return n_blk, tile_s


# --------------------------------------------------------------------------
# Wrapper
# --------------------------------------------------------------------------
def outconv_pallas(x_nchw, weight, bias, *, precision=None):
    """1x1 Conv2d forward (PyTorch OutConv).

    x_nchw : (N, C_in, H, W)
    weight : (C_out, C_in, 1, 1)   -- PyTorch Conv2d weight layout
    bias   : (C_out,)
    precision: optional lax.Precision for the matmul (pass
               jax.lax.Precision.HIGHEST for tighter f32 parity with PyTorch).
    returns: (N, C_out, H, W)
    """
    N, C_in, H, W = x_nchw.shape
    C_out = weight.shape[0]
    HW = H * W
    dtype = x_nchw.dtype
    itemsize = jnp.dtype(dtype).itemsize

    # Free reshapes only — no transposes, no padding.
    x3 = x_nchw.reshape(N, C_in, HW)
    w_mat = weight.reshape(C_out, C_in).astype(dtype)
    b_col = bias.reshape(C_out, 1).astype(jnp.float32)

    vmem_cap = _vmem_capacity_bytes()
    n_blk, tile_s = _choose_tiling(N, C_in, C_out, HW, itemsize, vmem_cap)
    grid = (N // n_blk, _cdiv(HW, tile_s))

    # Spatial axis in lanes for both input and output; ragged tails masked by Pallas.
    x_spec = pl.BlockSpec((n_blk, C_in, tile_s), lambda n, s: (n, 0, s))
    o_spec = pl.BlockSpec((n_blk, C_out, tile_s), lambda n, s: (n, 0, s))
    w_spec = pl.BlockSpec((C_out, C_in), lambda n, s: (0, 0))
    b_spec = pl.BlockSpec((C_out, 1), lambda n, s: (0, 0))

    kernel = functools.partial(_outconv_kernel, n_blk=n_blk, precision=precision)

    cost = pl.CostEstimate(
        flops=2 * N * HW * C_in * C_out,
        transcendentals=0,
        bytes_accessed=N * HW * (C_in + C_out) * itemsize
        + C_out * C_in * itemsize + C_out * 4,
    )

    # VMEM: double-buffered in/out blocks + resident weight/bias + headroom
    # (no double counting), capped below physical VMEM per generation.
    block_bytes = n_blk * tile_s * (C_in + C_out) * itemsize
    resident_bytes = C_out * C_in * itemsize + C_out * 4
    vmem_need = 2 * block_bytes + resident_bytes
    vmem_limit = int(min(max(int(vmem_need * 1.25) + (2 << 20), 16 << 20),
                         int(vmem_cap * 0.75)))

    out3 = pl.pallas_call(
        kernel,
        out_shape=jax.ShapeDtypeStruct((N, C_out, HW), dtype),
        grid_spec=pltpu.PrefetchScalarGridSpec(
            num_scalar_prefetch=0,
            grid=grid,
            in_specs=[x_spec, w_spec, b_spec],
            out_specs=o_spec,
        ),
        compiler_params=pltpu.CompilerParams(
            dimension_semantics=("parallel", "parallel"),
            vmem_limit_bytes=vmem_limit,
        ),
        cost_estimate=cost,
    )(x3, w_mat, b_col)

    return out3.reshape(N, C_out, H, W)


# --------------------------------------------------------------------------
# Self-test
# --------------------------------------------------------------------------
if __name__ == "__main__":
    root = jax.random.PRNGKey(0)

    def run_case(key, N, C_in, C_out, H, W):
        k1, k2, k3 = jax.random.split(key, 3)
        # Integer-valued data => exact results independent of matmul precision,
        # so the functional check is robust on any TPU generation.
        x = jax.random.randint(k1, (N, C_in, H, W), -3, 4).astype(jnp.float32)
        w = jax.random.randint(k2, (C_out, C_in, 1, 1), -3, 4).astype(jnp.float32)
        b = jax.random.randint(k3, (C_out,), -3, 4).astype(jnp.float32)
        y = jax.block_until_ready(outconv_pallas(x, w, b))
        y_ref = (jnp.einsum("nchw,oc->nohw", x, w.reshape(C_out, C_in))
                 + b[None, :, None, None])
        assert y.shape == (N, C_out, H, W)
        assert jnp.allclose(y, y_ref, atol=1e-5, rtol=1e-5), (
            f"mismatch for N={N} C_in={C_in} C_out={C_out} H={H} W={W}")

    k1, k2, k3 = jax.random.split(root, 3)
    # Canonical U-Net OutConv (64 -> 2): divisible H*W, multi-tile grid, MXU path.
    run_case(k1, N=2, C_in=64, C_out=2, H=16, W=16)
    # Ragged spatial extent (H*W = 100, not a multiple of 128): masked tail block.
    run_case(k2, N=1, C_in=4, C_out=3, H=10, W=10)
    # Small spatial, larger batch: exercises the batch-blocked (n_blk > 1) path.
    run_case(k3, N=8, C_in=8, C_out=4, H=8, W=8)

    print("KERNEL_OK")
</pallas_src>

<mosaic_0001>
module attributes {stable_mosaic.version = 11 : i64} {
  func.func @_outconv_kernel(%arg0: i32, %arg1: i32, %arg2: memref<1x64x128xf32, #tpu.memory_space<vmem>>, %arg3: memref<2x64xf32, #tpu.memory_space<vmem>>, %arg4: memref<2x1xf32, #tpu.memory_space<vmem>>, %arg5: memref<1x2x128xf32, #tpu.memory_space<vmem>>) attributes {dimension_semantics = [#tpu.dimension_semantics<parallel>, #tpu.dimension_semantics<parallel>], iteration_bounds = array<i64: 2, 2>, scalar_prefetch = 0 : i64, scratch_operands = 0 : i64, tpu.core_type = #tpu.core_type<tc>, window_params = [{transform_indices = @transform_0, window_bounds = array<i64: 1, 64, 128>}, {pipeline_mode = #tpu.pipeline_mode<synchronous>, transform_indices = @transform_1, window_bounds = array<i64: 2, 64>}, {pipeline_mode = #tpu.pipeline_mode<synchronous>, transform_indices = @transform_2, window_bounds = array<i64: 2, 1>}, {transform_indices = @transform_3, window_bounds = array<i64: 1, 2, 128>}]} {
    %c0 = arith.constant 0 : index
    %c0_0 = arith.constant 0 : index
    %0 = vector.load %arg3[%c0, %c0_0] : memref<2x64xf32, #tpu.memory_space<vmem>>, vector<2x64xf32>
    %c0_1 = arith.constant 0 : index
    %c0_2 = arith.constant 0 : index
    %1 = vector.load %arg4[%c0_1, %c0_2] : memref<2x1xf32, #tpu.memory_space<vmem>>, vector<2x1xf32>
    %c0_3 = arith.constant 0 : index
    %c0_4 = arith.constant 0 : index
    %c0_5 = arith.constant 0 : index
    %2 = vector.load %arg2[%c0_3, %c0_4, %c0_5] : memref<1x64x128xf32, #tpu.memory_space<vmem>>, vector<1x64x128xf32>
    %3 = vector.shape_cast %2 : vector<1x64x128xf32> to vector<64x128xf32>
    %cst = arith.constant dense<0.000000e+00> : vector<2x128xf32>
    %4 = tpu.matmul %0, %3, %cst {dimension_numbers = #tpu.dot_dimension_numbers<[1], [0], [0], [1], [0, 0, 1, 1], [], []>} : vector<2x64xf32>, vector<64x128xf32>, vector<2x128xf32> -> vector<2x128xf32>
    %5 = vector.broadcast %1 : vector<2x1xf32> to vector<2x128xf32>
    %6 = arith.addf %4, %5 : vector<2x128xf32>
    %c0_6 = arith.constant 0 : index
    %c0_7 = arith.constant 0 : index
    %c0_8 = arith.constant 0 : index
    %7 = vector.load %arg5[%c0_6, %c0_7, %c0_8] : memref<1x2x128xf32, #tpu.memory_space<vmem>>, vector<1x2x128xf32>
    %8 = vector.shape_cast %7 : vector<1x2x128xf32> to vector<2x128xf32>
    %9 = vector.shape_cast %6 : vector<2x128xf32> to vector<1x2x128xf32>
    tpu.vector_store %arg5[%c0_6, %c0_7, %c0_8], %9 {strides = array<i32>} : memref<1x2x128xf32, #tpu.memory_space<vmem>>, vector<1x2x128xf32>,
    return
  }
  func.func @transform_0(%arg0: i32, %arg1: i32) -> (i32, i32, i32) {
    %c0_i32 = arith.constant 0 : i32
    %c0_i32_0 = arith.constant 0 : i32
    return %arg0, %c0_i32, %arg1 : i32, i32, i32
  }
  func.func @transform_1(%arg0: i32, %arg1: i32) -> (i32, i32) {
    %c0_i32 = arith.constant 0 : i32
    %c0_i32_0 = arith.constant 0 : i32
    %c0_i32_1 = arith.constant 0 : i32
    return %c0_i32, %c0_i32_0 : i32, i32
  }
  func.func @transform_2(%arg0: i32, %arg1: i32) -> (i32, i32) {
    %c0_i32 = arith.constant 0 : i32
    %c0_i32_0 = arith.constant 0 : i32
    %c0_i32_1 = arith.constant 0 : i32
    return %c0_i32, %c0_i32_0 : i32, i32
  }
  func.func @transform_3(%arg0: i32, %arg1: i32) -> (i32, i32, i32) {
    %c0_i32 = arith.constant 0 : i32
    %c0_i32_0 = arith.constant 0 : i32
    return %arg0, %c0_i32, %arg1 : i32, i32, i32
  }
}

</mosaic_0001>

<llo_original>
// kernel: tpu_custom_call.1
$region0: #{tpu_custom_call.1}
  #allocation0 [shape = 'u32[]', space=smem, size = 0x4, offset = 0x4, fixed_abs, tag = 'smem constant byte address 0x4 - core index']
  #allocation1 [shape = 'u32[72,128]{1,0:T(1,128)}', space=vmem, size = 0x9000, scoped, tag = 'internal scratch']
  %s0 = inlined_call_operand.hbm [shape: f32[2,64,256], index: 0, kind: input, shape index: {}]
  %s1 = inlined_call_operand.vmem [shape: f32[2,64], index: 1, kind: input, shape index: {}]
  %s2 = inlined_call_operand.vmem [shape: f32[2,1], index: 2, kind: input, shape index: {}]
  %s3 = inlined_call_operand.hbm [shape: f32[2,2,256], index: 3, kind: output, shape index: {}]
  %s4 = sld [smem:[#allocation0]]
  $region49: #{tpu_custom_call.1} parent=0
    _
  %s6 = ssub.s32 1, %s4
  %s7 = scalar_select 0, %s6, %s4
  $region1: #{tpu_custom_call.1} parent=0
    #allocation2 [shape = 'u8[65536]{0}', space=vmem, size = 0x10000, scoped, tag = 'input window, operand 0']
    #allocation3 [shape = 's32[2]{0}', space=sflag, size = 0x8, scoped, tag = 'scoped memory for tpu_custom_call.1']
    #allocation4 [shape = 's32[2]{0}', space=sflag, size = 0x8, scoped, tag = 'scoped memory for tpu_custom_call.1']
    #allocation5 [shape = 'u8[2048]{0}', space=vmem, size = 0x800, scoped, tag = 'output window, operand 0']
    %8 = vsyncpa [#allocation3], 0
    %s9 = scalar_lea.sflag [#allocation3], 1
    %10 = vsyncpa %s9, 0
    %11 = vsyncpa [#allocation4], 0
    %s12 = scalar_lea.sflag [#allocation4], 1
    %13 = vsyncpa %s12, 0
    loop: start=0, step=1, limit=6
    $region2: #{tpu_custom_call.1} parent=1 // loop_pre_header
      _
    $region3: #{tpu_custom_call.1} parent=1 // loop_header
      %s15 = sphi 0, %s19
      %p16 = scmp.ge.s32.totalorder %s15, 6
      %s22 = sphi 0, %s34
      %s23 = sphi 0, %s30
      %s24 = sphi 0, %s22
      %s25 = sphi 0, %s23
      %s26 = sphi 0, %s24
      %s27 = sphi 0, %s25
      %s39 = sphi 0, %s41
      %s42 = sphi 0, %s39
      %s43 = sphi 0, %s42
      %s59 = sphi 0, %s43
      %s63 = sphi 0, %s63
      %s65 = sphi 0, %s63
      %s66 = sphi 0, %s65
      %s80 = sphi 0, %s66
      %s84 = sphi 0, %s84
      %s86 = sphi 0, %s84
      %s87 = sphi 0, %s86
      %s101 = sphi 0, %s87
      %s109 = sphi 0, %s111
      %s112 = sphi 0, %s109
      %s113 = sphi 0, %s112
      %s129 = sphi 0, %s113
    $region4: #{tpu_custom_call.1} parent=1 // loop_header_branch
      %18 = sbr.rel (%p16) target = $region8
    $region5: #{tpu_custom_call.1} parent=1 // loop_body
      %s20 = ssub.s32 %s15, 1
      %s21 = ssub.s32 %s15, 2
      %s28 = sadd.s32 1, %s23
      %p29 = scmp.ge.s32.totalorder %s28, 2
      %s30 = scalar_select %p29, 0, %s28
      %s31 = sadd.s32 1, %s22
      %s32 = scalar_select %p29, %s31, %s22
      %p33 = scmp.ge.s32.totalorder %s32, 2
      %s34 = scalar_select %p33, 0, %s32
      %s35 = ssub.s32 %s22, %s34
      %s36 = ssub.s32 %s23, %s30
      %s37 = sor.u32 %s35, %s36
      %p38 = scmp.eq.s32.totalorder %s37, 0
      %s40 = sadd.s32 %s39, 1
      %s41 = scalar_select %p38, %s39, %s40
      %p44 = pneg %p38
      %p45 = scmp.eq.s32.totalorder %s15, 3
      %p46 = por %p44, %p45
      %p47 = scmp.ne.s32.totalorder %s39, %s42
      %p48 = scmp.eq.s32.totalorder %s15, 0
      %p49 = por %p47, %p48
      %p50 = scmp.ne.s32.totalorder %s39, %s42
      %p51 = scmp.eq.s32.totalorder %s20, 3
      %p52 = por %p50, %p51
      %p53 = scmp.ne.s32.totalorder %s42, %s43
      %p54 = scmp.eq.s32.totalorder %s20, 0
      %p55 = por %p53, %p54
      %p56 = scmp.ne.s32.totalorder %s42, %s43
      %p57 = scmp.eq.s32.totalorder %s21, 3
      %p58 = por %p56, %p57
      %p60 = scmp.ne.s32.totalorder %s43, %s59
      %p61 = scmp.eq.s32.totalorder %s21, 0
      %p62 = por %p60, %p61
      %s64 = sadd.s32 %s63, 1
      %p67 = scmp.eq.s32.totalorder %s15, 3
      %p68 = scmp.ne.s32.totalorder %s63, %s65
      %p69 = scmp.eq.s32.totalorder %s15, 0
      %p70 = por %p68, %p69
      %p71 = scmp.ne.s32.totalorder %s63, %s65
      %p72 = scmp.eq.s32.totalorder %s20, 3
      %p73 = por %p71, %p72
      %p74 = scmp.ne.s32.totalorder %s65, %s66
      %p75 = scmp.eq.s32.totalorder %s20, 0
      %p76 = por %p74, %p75
      %p77 = scmp.ne.s32.totalorder %s65, %s66
      %p78 = scmp.eq.s32.totalorder %s21, 3
      %p79 = por %p77, %p78
      %p81 = scmp.ne.s32.totalorder %s66, %s80
      %p82 = scmp.eq.s32.totalorder %s21, 0
      %p83 = por %p81, %p82
      %s85 = sadd.s32 %s84, 1
      %p88 = scmp.eq.s32.totalorder %s15, 3
      %p89 = scmp.ne.s32.totalorder %s84, %s86
      %p90 = scmp.eq.s32.totalorder %s15, 0
      %p91 = por %p89, %p90
      %p92 = scmp.ne.s32.totalorder %s84, %s86
      %p93 = scmp.eq.s32.totalorder %s20, 3
      %p94 = por %p92, %p93
      %p95 = scmp.ne.s32.totalorder %s86, %s87
      %p96 = scmp.eq.s32.totalorder %s20, 0
      %p97 = por %p95, %p96
      %p98 = scmp.ne.s32.totalorder %s86, %s87
      %p99 = scmp.eq.s32.totalorder %s21, 3
      %p100 = por %p98, %p99
      %p102 = scmp.ne.s32.totalorder %s87, %s101
      %p103 = scmp.eq.s32.totalorder %s21, 0
      %p104 = por %p102, %p103
      %s105 = ssub.s32 %s22, %s34
      %s106 = ssub.s32 %s23, %s30
      %s107 = sor.u32 %s105, %s106
      %p108 = scmp.eq.s32.totalorder %s107, 0
      %s110 = sadd.s32 %s109, 1
      %s111 = scalar_select %p108, %s109, %s110
      %p114 = pneg %p108
      %p115 = scmp.eq.s32.totalorder %s15, 3
      %p116 = por %p114, %p115
      %p117 = scmp.ne.s32.totalorder %s109, %s112
      %p118 = scmp.eq.s32.totalorder %s15, 0
      %p119 = por %p117, %p118
      %p120 = scmp.ne.s32.totalorder %s109, %s112
      %p121 = scmp.eq.s32.totalorder %s20, 3
      %p122 = por %p120, %p121
      %p123 = scmp.ne.s32.totalorder %s112, %s113
      %p124 = scmp.eq.s32.totalorder %s20, 0
      %p125 = por %p123, %p124
      %p126 = scmp.ne.s32.totalorder %s112, %s113
      %p127 = scmp.eq.s32.totalorder %s21, 3
      %p128 = por %p126, %p127
      %p130 = scmp.ne.s32.totalorder %s113, %s129
      %p131 = scmp.eq.s32.totalorder %s21, 0
      %p132 = por %p130, %p131
      %p133 = scmp.le.s32.totalorder 1, %s15
      %p134 = scmp.lt.s32.totalorder %s15, 5
      %p135 = pnand %p133, %p134
      %p136 = pneg %p135
      // Predicated region
      $region9: #{tpu_custom_call.1} parent=5 // pred_check
        _
      $region10: #{tpu_custom_call.1} parent=5 // pred_check_branch
        %138 = sbr.rel (%p135) target = $region12
      $region11: #{tpu_custom_call.1} parent=5 // pred_region
        %s139 = ssub.s32 %s15, 1
        // Predicated region
        $region13: #{tpu_custom_call.1} parent=11 // pred_check
          %p140 = pneg %p76
        $region14: #{tpu_custom_call.1} parent=11 // pred_check_branch
          %142 = sbr.rel (%p140) target = $region16
        $region15: #{tpu_custom_call.1} parent=11 // pred_region
          _
        $region16: #{tpu_custom_call.1} parent=11 // pred_fallthru
          _
        // Predicated region
        $region17: #{tpu_custom_call.1} parent=11 // pred_check
          %p143 = pneg %p97
        $region18: #{tpu_custom_call.1} parent=11 // pred_check_branch
          %145 = sbr.rel (%p143) target = $region20
        $region19: #{tpu_custom_call.1} parent=11 // pred_region
          _
        $region20: #{tpu_custom_call.1} parent=11 // pred_fallthru
          _
      $region12: #{tpu_custom_call.1} parent=5 // pred_fallthru
        _
      %p146 = scmp.lt.s32.totalorder %s15, 4
      // Predicated region
      $region21: #{tpu_custom_call.1} parent=5 // pred_check
        %p147 = pneg %p146
      $region22: #{tpu_custom_call.1} parent=5 // pred_check_branch
        %149 = sbr.rel (%p147) target = $region24
      $region23: #{tpu_custom_call.1} parent=5 // pred_region
        // Predicated region
        $region25: #{tpu_custom_call.1} parent=23 // pred_check
          %p150 = pneg %p49
        $region26: #{tpu_custom_call.1} parent=23 // pred_check_branch
          %152 = sbr.rel (%p150) target = $region28
        $region27: #{tpu_custom_call.1} parent=23 // pred_region
          %s153 = sand.u32 %s39, 1
          %s154 = scalar_lea.sflag [#allocation3], %s153
          %s155 = sand.u32 %s39, 1
          %s156 = smul.addr %s155, 64
          %s157 = scalar_lea.vmem [#allocation2], %s156
          %159 = vsyncadd %s154, 0
          %s160 = smul.addr %s22, 16
          %s161 = sadd.s32 %s23, %s160
          %s162 = smul.addr %s161, 8
          %s163 = scalar_lea.hbm %s0, %s162
          %s164 = sshll.u32 %s163, 4
          %s165 = int_to_ptr.hbm [resolvable:$true] %s164
          %s166 = sshll.u32 %s157, 4
          %s167 = int_to_ptr.vmem [resolvable:$true] %s166
          %172 = dma.hbm_to_vmem [thread:$0]  %s165, 1024, %s167, %s154, 256, 128, 8
        $region28: #{tpu_custom_call.1} parent=23 // pred_fallthru
          _
      $region24: #{tpu_custom_call.1} parent=5 // pred_fallthru
        _
      %p173 = scmp.le.s32.totalorder 1, %s15
      %p174 = scmp.lt.s32.totalorder %s15, 5
      %p175 = pnand %p173, %p174
      %p176 = pneg %p175
      // Predicated region
      $region29: #{tpu_custom_call.1} parent=5 // pred_check
        _
      $region30: #{tpu_custom_call.1} parent=5 // pred_check_branch
        %178 = sbr.rel (%p175) target = $region32
      $region31: #{tpu_custom_call.1} parent=5 // pred_region
        %s179 = ssub.s32 %s15, 1
        %s180 = sand.u32 %s42, 1
        %s181 = scalar_lea.sflag [#allocation3], %s180
        %s182 = sand.u32 %s42, 1
        %s183 = smul.addr %s182, 64
        %s184 = scalar_lea.vmem [#allocation2], %s183
        // Predicated region
        $region33: #{tpu_custom_call.1} parent=31 // pred_check
          %p185 = pneg %p55
        $region34: #{tpu_custom_call.1} parent=31 // pred_check_branch
          %187 = sbr.rel (%p185) target = $region36
        $region35: #{tpu_custom_call.1} parent=31 // pred_region
          %189 = dma.done %s181, 1024
        $region36: #{tpu_custom_call.1} parent=31 // pred_fallthru
          _
        %s190 = sand.u32 %s42, 1
        %s191 = scalar_lea.sflag [#allocation3], %s190
        %s192 = sand.u32 %s42, 1
        %s193 = smul.addr %s192, 64
        %s194 = scalar_lea.vmem [#allocation2], %s193
        %p195 = pneg %p55
        %p196 = pneg %p52
        %p197 = pneg %p76
        %p198 = pneg %p73
        %p199 = pneg %p97
        %p200 = pneg %p94
        %p201 = pneg %p125
        %p202 = pneg %p122
        %s203 = sand.u32 %s112, 1
        %s204 = scalar_lea.sflag [#allocation4], %s203
        %s205 = sand.u32 %s112, 1
        %s206 = smul.addr %s205, 2
        %s207 = scalar_lea.vmem [#allocation5], %s206
        %v208 = vld [vmem:[%s1] sm:$0x3]
        %v209 = vld [vmem:[%s2] sm:$0x3]
        %v210 = vld [vmem:[%s184] sm:$0xff]
        %v211 = vld [vmem:[%s184 + $0x8] sm:$0xff]
        %v212 = vld [vmem:[%s184 + $0x10] sm:$0xff]
        %v213 = vld [vmem:[%s184 + $0x18] sm:$0xff]
        %v214 = vld [vmem:[%s184 + $0x20] sm:$0xff]
        %v215 = vld [vmem:[%s184 + $0x28] sm:$0xff]
        %v216 = vld [vmem:[%s184 + $0x30] sm:$0xff]
        %v217 = vld [vmem:[%s184 + $0x38] sm:$0xff]
        %219 = vset.pattern.permute.xlu0 0
        %220 = vperm.xlu0 %219, %v209
        %v221 = vpop.permute.xlu0 %220
        %vm223 = vcmask 523264
        %v225 = vsel %vm223, %v208, 0
        %227 = vmatpush.msra.mxu0 0.0
        %228 = vmatpush.msra.mxu0 0.0
        %229 = vmatpush.msra.mxu0 0.0
        %230 = vmatpush.msra.mxu0 0.0
        %231 = vmatpush.msra.mxu0 0.0
        %232 = vmatpush.msra.mxu0 0.0
        %233 = vmatpush.msra.mxu0 0.0
        %234 = vmatpush.msra.mxu0 0.0
        %235 = vmatpush.msra.mxu0 %v217
        %236 = vmatpush.msra.mxu0 %v216
        %237 = vmatpush.msra.mxu0 %v215
        %238 = vmatpush.msra.mxu0 %v214
        %239 = vmatpush.msra.mxu0 %v213
        %240 = vmatpush.msra.mxu0 %v212
        %241 = vmatpush.msra.mxu0 %v211
        %242 = vmatpush.msra.mxu0 %v210
        %243 = vmatmul.f32.gmra.mxu0 %v225
        %v244 = vpop.f32.mrf.mxu0
        %v245 = vadd.f32 %v221, %v244
        %246 = vdwg.mxu0
        %247 = vst [vmem:[%s207] sm:$0x3] %v245
        %s248 = sand.u32 %s112, 1
        %s249 = scalar_lea.sflag [#allocation4], %s248
        %s250 = sand.u32 %s112, 1
        %s251 = smul.addr %s250, 2
        %s252 = scalar_lea.vmem [#allocation5], %s251
        // Predicated region
        $region37: #{tpu_custom_call.1} parent=31 // pred_check
          %p253 = pneg %p122
        $region38: #{tpu_custom_call.1} parent=31 // pred_check_branch
          %255 = sbr.rel (%p253) target = $region40
        $region39: #{tpu_custom_call.1} parent=31 // pred_region
          %257 = vsyncadd %s249, 0
          %s258 = smul.addr %s24, 2
          %s259 = sadd.s32 %s25, %s258
          %s260 = smul.addr %s259, 2
          %s261 = scalar_lea.hbm %s3, %s260
          %s263 = sshll.u32 %s252, 4
          %s264 = int_to_ptr.vmem [resolvable:$true] %s263
          %s265 = sshll.u32 %s261, 4
          %s266 = int_to_ptr.hbm [resolvable:$true] %s265
          %268 = dma.vmem_to_hbm [thread:$0]  %s264, 32, %s266, %s249
        $region40: #{tpu_custom_call.1} parent=31 // pred_fallthru
          _
      $region32: #{tpu_custom_call.1} parent=5 // pred_fallthru
        _
      %p269 = scmp.le.s32.totalorder 2, %s15
      // Predicated region
      $region41: #{tpu_custom_call.1} parent=5 // pred_check
        %p270 = pneg %p269
      $region42: #{tpu_custom_call.1} parent=5 // pred_check_branch
        %272 = sbr.rel (%p270) target = $region44
      $region43: #{tpu_custom_call.1} parent=5 // pred_region
        %s273 = ssub.s32 %s15, 2
        // Predicated region
        $region45: #{tpu_custom_call.1} parent=43 // pred_check
          %p274 = pneg %p128
        $region46: #{tpu_custom_call.1} parent=43 // pred_check_branch
          %276 = sbr.rel (%p274) target = $region48
        $region47: #{tpu_custom_call.1} parent=43 // pred_region
          %s277 = sand.u32 %s113, 1
          %s278 = scalar_lea.sflag [#allocation4], %s277
          %s279 = sand.u32 %s113, 1
          %s280 = smul.addr %s279, 2
          %s281 = scalar_lea.vmem [#allocation5], %s280
          %283 = dma.done %s278, 32
        $region48: #{tpu_custom_call.1} parent=43 // pred_fallthru
          _
      $region44: #{tpu_custom_call.1} parent=5 // pred_fallthru
        _
    $region6: #{tpu_custom_call.1} parent=1 // loop_footer
      %s19 = sadd.s32 1, %s15
    $region7: #{tpu_custom_call.1} parent=1 // loop_footer_branch
      %14 = sbr.rel target = $region3
    $region8: #{tpu_custom_call.1} parent=1 // loop_exit
      _
    %284 = vsyncpa [#allocation3], 1
    %s285 = scalar_lea.sflag [#allocation3], 1
    %286 = vsyncpa %s285, 1
    %287 = vsyncpa [#allocation4], 1
    %s288 = scalar_lea.sflag [#allocation4], 1
    %289 = vsyncpa %s288, 1

</llo_original>
